<compile_context>
chip_gen: v6e
topology: v6e:2x2x1
jax: 0.10.0
libtpu: 0.0.40
codegen_flags: <defaults>
</compile_context>

<pallas_src>
import math

import jax
import jax.numpy as jnp
from jax.experimental import pallas as pl
from jax.experimental.pallas import tpu as pltpu


def _floor_divide_kernel(num_ref, den_ref, out_ref):
    # torch.floor_divide == floor(n / d)  (rounds toward -inf).
    # Scalar operands arrive as (1, 1) blocks and broadcast against the tile.
    n = num_ref[...].astype(jnp.float32)
    d = den_ref[...].astype(jnp.float32)
    out_ref[...] = jnp.floor(n / d).astype(out_ref.dtype)


def _sublane_tile(dtype):
    itemsize = jnp.dtype(dtype).itemsize
    if itemsize >= 4:
        return 8
    if itemsize == 2:
        return 16
    return 32


def floor_divide(numerator, denominator):
    numerator = jnp.asarray(numerator)
    denominator = jnp.asarray(denominator)

    out_shape = jnp.broadcast_shapes(numerator.shape, denominator.shape)
    out_dtype = jnp.result_type(numerator.dtype, denominator.dtype)
    # TODO(synk): exact integer floor_divide for |values| >= 2^24 is not
    # implemented (division runs in f32); exact for the module's float case.

    total = math.prod(out_shape) if out_shape else 1
    if total == 0:
        return jnp.zeros(out_shape, out_dtype)

    itemsize = jnp.dtype(out_dtype).itemsize
    sub = _sublane_tile(out_dtype)

    # ---- operand prep: keep size-1 operands tiny (no HBM broadcast pass);
    # only materialize a broadcast when the shape genuinely differs.  dtype
    # casts happen inside the kernel, never as a separate HBM pass.
    def prep(x):
        if x.size == 1:
            return x.reshape(1, 1), True
        if x.shape != out_shape:
            # TODO(synk): non-scalar broadcast operands are still materialized.
            x = jnp.broadcast_to(x, out_shape)
        return x, False

    num, num_scalar = prep(numerator)
    den, den_scalar = prep(denominator)

    # ---- lane-dense 2-D layout: widest cols (multiple of 128) dividing total
    # while keeping rows >= the sublane tile so vregs are fully populated.
    cols = None
    for c in (4096, 2048, 1024, 512, 256, 128):
        if total % c == 0 and total // c >= sub:
            cols = c
            break
    if cols is None:
        for c in (512, 256, 128):
            if total % c == 0:
                cols = c
                break
    padded_total = total
    if cols is None:
        cols = 128
        padded_total = pl.cdiv(total, cols) * cols  # minimal pad, < 128 elems
    rows = padded_total // cols

    def to2d(x, is_scalar):
        if is_scalar:
            return x  # stays (1, 1)
        x = x.reshape(-1)
        if padded_total != total:
            x = jnp.pad(x, (0, padded_total - total), constant_values=1)
        return x.reshape(rows, cols)

    num2d = to2d(num, num_scalar)
    den2d = to2d(den, den_scalar)

    # ---- block sizing.
    total_bytes = total * itemsize
    # ~4 MiB per array per block: big enough that the ~0.35us per-step cost is
    # noise even at v7x HBM bandwidth.  3 arrays x 2 pipeline buffers x 4 MiB
    # = 24 MiB, covered by the explicit scoped-VMEM limit below.
    target_block_bytes = 4 * 1024 * 1024
    max_block_rows = max(sub, (target_block_bytes // (cols * itemsize)) // sub * sub)

    # Never collapse to grid=(1,) above ~1 MiB: keep >= 8 steps so DMAs overlap
    # compute and "parallel" sharding feeds both v7x TensorCores.
    min_steps = 8 if total_bytes > (1 << 20) else 1
    steps_cap_rows = max(sub, (rows // min_steps) // sub * sub)

    if rows < sub:
        block_rows = rows  # tiny array: block equals the full row extent
    else:
        block_rows = min(max_block_rows, steps_cap_rows)
        block_rows = max(sub, min(block_rows, (rows // sub) * sub))

    main_spec = lambda: pl.BlockSpec((block_rows, cols), lambda i: (i, 0))
    scalar_spec = lambda: pl.BlockSpec((1, 1), lambda i: (0, 0))

    grid = (pl.cdiv(rows, block_rows),)  # ragged last block handled by Pallas

    out2d = pl.pallas_call(
        _floor_divide_kernel,
        out_shape=jax.ShapeDtypeStruct((rows, cols), out_dtype),
        grid=grid,
        in_specs=[
            scalar_spec() if num_scalar else main_spec(),
            scalar_spec() if den_scalar else main_spec(),
        ],
        out_specs=pl.BlockSpec((block_rows, cols), lambda i: (i, 0)),
        compiler_params=pltpu.CompilerParams(
            dimension_semantics=("parallel",),
            vmem_limit_bytes=40 * 1024 * 1024,
        ),
    )(num2d, den2d)

    out_flat = out2d.reshape(-1)
    if padded_total != total:
        out_flat = out_flat[:total]
    return out_flat.reshape(out_shape)


if __name__ == "__main__":
    key = jax.random.PRNGKey(0)
    k1, k2, k3 = jax.random.split(key, 3)

    # Small NCHW-like shapes consistent with an elementwise binary op.
    numerator = jax.random.normal(k1, (2, 4, 16, 16), dtype=jnp.float32) * 10.0
    # Keep the denominator away from zero.
    denominator = (
        jax.random.uniform(k2, (2, 4, 16, 16), dtype=jnp.float32, minval=0.5, maxval=3.0)
        * jnp.where(jax.random.bernoulli(k3, 0.5, (2, 4, 16, 16)), 1.0, -1.0)
    )

    out = floor_divide(numerator, denominator)
    out = jax.block_until_ready(out)

    # Reference check against plain JAX (same f32 division path -> bit exact).
    ref = jnp.floor(numerator / denominator)
    assert out.shape == ref.shape
    assert out.dtype == ref.dtype
    assert jnp.array_equal(out, ref), "mismatch vs reference"

    # Exercise the scalar-denominator path (no HBM broadcast materialization).
    out_s = jax.block_until_ready(floor_divide(numerator, jnp.float32(2.5)))
    ref_s = jnp.floor(numerator / jnp.float32(2.5))
    assert jnp.array_equal(out_s, ref_s), "scalar-operand path mismatch"

    print("KERNEL_OK")
</pallas_src>

<mosaic_0001>
module attributes {stable_mosaic.version = 11 : i64} {
  func.func @_floor_divide_kernel(%arg0: i32, %arg1: memref<8x256xf32, #tpu.memory_space<vmem>>, %arg2: memref<8x256xf32, #tpu.memory_space<vmem>>, %arg3: memref<8x256xf32, #tpu.memory_space<vmem>>) attributes {dimension_semantics = [#tpu.dimension_semantics<parallel>], iteration_bounds = array<i64: 1>, scalar_prefetch = 0 : i64, scratch_operands = 0 : i64, tpu.core_type = #tpu.core_type<tc>, window_params = [{transform_indices = @transform_0, window_bounds = array<i64: 8, 256>}, {transform_indices = @transform_1, window_bounds = array<i64: 8, 256>}, {transform_indices = @transform_2, window_bounds = array<i64: 8, 256>}]} {
    %c0 = arith.constant 0 : index
    %c0_0 = arith.constant 0 : index
    %0 = vector.load %arg1[%c0, %c0_0] : memref<8x256xf32, #tpu.memory_space<vmem>>, vector<8x256xf32>
    %c0_1 = arith.constant 0 : index
    %c0_2 = arith.constant 0 : index
    %1 = vector.load %arg2[%c0_1, %c0_2] : memref<8x256xf32, #tpu.memory_space<vmem>>, vector<8x256xf32>
    %2 = arith.divf %0, %1 : vector<8x256xf32>
    %3 = math.floor %2 : vector<8x256xf32>
    %c0_3 = arith.constant 0 : index
    %c0_4 = arith.constant 0 : index
    %4 = vector.load %arg3[%c0_3, %c0_4] : memref<8x256xf32, #tpu.memory_space<vmem>>, vector<8x256xf32>
    tpu.vector_store %arg3[%c0_3, %c0_4], %3 {strides = array<i32>} : memref<8x256xf32, #tpu.memory_space<vmem>>, vector<8x256xf32>,
    return
  }
  func.func @transform_0(%arg0: i32) -> (i32, i32) {
    %c0_i32 = arith.constant 0 : i32
    %c0_i32_0 = arith.constant 0 : i32
    return %arg0, %c0_i32 : i32, i32
  }
  func.func @transform_1(%arg0: i32) -> (i32, i32) {
    %c0_i32 = arith.constant 0 : i32
    %c0_i32_0 = arith.constant 0 : i32
    return %arg0, %c0_i32 : i32, i32
  }
  func.func @transform_2(%arg0: i32) -> (i32, i32) {
    %c0_i32 = arith.constant 0 : i32
    %c0_i32_0 = arith.constant 0 : i32
    return %arg0, %c0_i32 : i32, i32
  }
}

</mosaic_0001>

<llo_original>
// kernel: tpu_custom_call.1
$region0: #{tpu_custom_call.1}
  #allocation0 [shape = 'u32[]', space=smem, size = 0x4, offset = 0x4, fixed_abs, tag = 'smem constant byte address 0x4 - core index']
  #allocation1 [shape = 'u32[144,128]{1,0:T(1,128)}', space=vmem, size = 0x12000, scoped, tag = 'internal scratch']
  %s0 = inlined_call_operand.hbm [shape: f32[8,256], index: 0, kind: input, shape index: {}]
  %s1 = inlined_call_operand.hbm [shape: f32[8,256], index: 1, kind: input, shape index: {}]
  %s2 = inlined_call_operand.hbm [shape: f32[8,256], index: 2, kind: output, shape index: {}]
  %s3 = sld [smem:[#allocation0]]
  $region26: #{tpu_custom_call.1} parent=0
    _
  %s5 = ssub.s32 1, %s3
  %s6 = scalar_select 0, %s5, %s3
  $region1: #{tpu_custom_call.1} parent=0
    #allocation2 [shape = 'u8[8192]{0}', space=vmem, size = 0x2000, scoped, tag = 'input window, operand 0, single buffered']
    #allocation3 [shape = 's32[1]{0}', space=sflag, size = 0x4, scoped, tag = 'scoped memory for tpu_custom_call.1']
    #allocation4 [shape = 's32[1]{0}', space=sflag, size = 0x4, scoped, tag = 'scoped memory for tpu_custom_call.1']
    #allocation5 [shape = 'u8[8192]{0}', space=vmem, size = 0x2000, scoped, tag = 'input window, operand 1, single buffered']
    #allocation6 [shape = 's32[1]{0}', space=sflag, size = 0x4, scoped, tag = 'scoped memory for tpu_custom_call.1']
    #allocation7 [shape = 'u8[8192]{0}', space=vmem, size = 0x2000, scoped, tag = 'output window, operand 0, single buffered']
    %7 = vsyncpa [#allocation3], 0
    %8 = vsyncpa [#allocation6], 0
    %9 = vsyncpa [#allocation4], 0
    // Predicated region
    $region2: #{tpu_custom_call.1} parent=1 // pred_check
      _
    $region3: #{tpu_custom_call.1} parent=1 // pred_check_branch
      %11 = sbr.rel (0) target = $region5
    $region4: #{tpu_custom_call.1} parent=1 // pred_region
      %s13 = ssub.s32 256, 256
      %14 = vsyncadd [#allocation3], %s13
      %s16 = sshll.u32 [#allocation2], 4
      %s17 = int_to_ptr.vmem [resolvable:$true] %s16
      %19 = dma.hbm_to_vmem [thread:$0]  %s0, 256, %s17, [#allocation3]
    $region5: #{tpu_custom_call.1} parent=1 // pred_fallthru
      _
    // Predicated region
    $region6: #{tpu_custom_call.1} parent=1 // pred_check
      _
    $region7: #{tpu_custom_call.1} parent=1 // pred_check_branch
      %21 = sbr.rel (0) target = $region9
    $region8: #{tpu_custom_call.1} parent=1 // pred_region
      %s23 = ssub.s32 256, 256
      %24 = vsyncadd [#allocation6], %s23
      %s26 = sshll.u32 [#allocation5], 4
      %s27 = int_to_ptr.vmem [resolvable:$true] %s26
      %29 = dma.hbm_to_vmem [thread:$0]  %s1, 256, %s27, [#allocation6]
    $region9: #{tpu_custom_call.1} parent=1 // pred_fallthru
      _
    // Predicated region
    $region10: #{tpu_custom_call.1} parent=1 // pred_check
      _
    $region11: #{tpu_custom_call.1} parent=1 // pred_check_branch
      %31 = sbr.rel (0) target = $region13
    $region12: #{tpu_custom_call.1} parent=1 // pred_region
      %32 = dma.done [#allocation3], 256
    $region13: #{tpu_custom_call.1} parent=1 // pred_fallthru
      _
    // Predicated region
    $region14: #{tpu_custom_call.1} parent=1 // pred_check
      _
    $region15: #{tpu_custom_call.1} parent=1 // pred_check_branch
      %34 = sbr.rel (0) target = $region17
    $region16: #{tpu_custom_call.1} parent=1 // pred_region
      %35 = dma.done [#allocation6], 256
    $region17: #{tpu_custom_call.1} parent=1 // pred_fallthru
      _
    %v36 = vld [vmem:[#allocation2] sm:$0xff]
    %v37 = vld [vmem:[#allocation2 + $0x8] sm:$0xff]
    %v38 = vld [vmem:[#allocation5] sm:$0xff]
    %v39 = vld [vmem:[#allocation5 + $0x8] sm:$0xff]
    %v40 = vrcp.pop %v38
    %v41 = vmul.f32 %v36, %v40
    %v42 = vrcp.pop %v39
    %v43 = vmul.f32 %v37, %v42
    %v44 = vfloor.f32 %v41
    %v45 = vfloor.f32 %v43
    %46 = vst [vmem:[#allocation7] sm:$0xff] %v44
    %47 = vst [vmem:[#allocation7 + $0x8] sm:$0xff] %v45
    // Predicated region
    $region18: #{tpu_custom_call.1} parent=1 // pred_check
      _
    $region19: #{tpu_custom_call.1} parent=1 // pred_check_branch
      %49 = sbr.rel (0) target = $region21
    $region20: #{tpu_custom_call.1} parent=1 // pred_region
      %s51 = ssub.s32 256, 256
      %52 = vsyncadd [#allocation4], %s51
      %s54 = sshll.u32 [#allocation7], 4
      %s55 = int_to_ptr.vmem [resolvable:$true] %s54
      %57 = dma.vmem_to_hbm [thread:$0]  %s55, 256, %s2, [#allocation4]
    $region21: #{tpu_custom_call.1} parent=1 // pred_fallthru
      _
    // Predicated region
    $region22: #{tpu_custom_call.1} parent=1 // pred_check
      _
    $region23: #{tpu_custom_call.1} parent=1 // pred_check_branch
      %59 = sbr.rel (0) target = $region25
    $region24: #{tpu_custom_call.1} parent=1 // pred_region
      %60 = dma.done [#allocation4], 256
    $region25: #{tpu_custom_call.1} parent=1 // pred_fallthru
      _
    %61 = vsyncpa [#allocation3], 1
    %62 = vsyncpa [#allocation6], 1
    %63 = vsyncpa [#allocation4], 1

</llo_original>
